<compile_context>
chip_gen: v7x
topology: tpu7x:2x2x1
jax: 0.10.0
libtpu: 0.0.40
codegen_flags: <defaults>
</compile_context>

<pallas_src>
import math
import functools

import jax
import jax.numpy as jnp
from jax import lax
from jax.experimental import pallas as pl
from jax.experimental.pallas import tpu as pltpu


def _cdiv(a, b):
    return -(-a // b)


def _round_up(x, m):
    return ((x + m - 1) // m) * m


# ----------------------------- Pallas kernels -------------------------------

def _conv_folded_kernel(x_ref, w_ref, b_ref, o_ref, *, K, S, TOH, OW, KC, OCP):
    """kj taps pre-folded onto lanes (small C).
    x_ref: (1, SLAB_H, OW, K*C) bf16   w_ref: (K, K*C, OCP) bf16
    b_ref: (1, OCP) f32                o_ref: (1, TOH, OW, OCP) f32
    """
    acc = None
    for ki in range(K):                                  # unrolled tap-row loop
        hs = pl.ds(ki, TOH) if S == 1 else pl.ds(ki, TOH, S)
        a = x_ref[0, hs, :, :].reshape(TOH * OW, KC)
        p = jnp.dot(a, w_ref[ki], preferred_element_type=jnp.float32)
        acc = p if acc is None else acc + p
    acc = acc + b_ref[...]
    o_ref[...] = acc.reshape(1, TOH, OW, OCP)


def _conv_taps_kernel(x_ref, w_ref, b_ref, o_ref, *, K, S, TOH, OW, C, OCP):
    """Per-tap dots with contraction over C (large C).
    x_ref: (1, SLAB_H, Wp, C) bf16     w_ref: (K, K, C, OCP) bf16
    b_ref: (1, OCP) f32                o_ref: (1, TOH, OW, OCP) f32
    """
    acc = None
    for ki in range(K):
        hs = pl.ds(ki, TOH) if S == 1 else pl.ds(ki, TOH, S)
        for kj in range(K):
            ws = pl.ds(kj, OW) if S == 1 else pl.ds(kj, OW, S)
            a = x_ref[0, hs, ws, :].reshape(TOH * OW, C)
            p = jnp.dot(a, w_ref[ki, kj], preferred_element_type=jnp.float32)
            acc = p if acc is None else acc + p
    acc = acc + b_ref[...]
    o_ref[...] = acc.reshape(1, TOH, OW, OCP)


# ----------------------------- wrapper ---------------------------------------

def _fused_conv2d(xp, w, b, stride):
    """Conv over an already reflection-padded NHWC image.
    xp: (N, Hp, Wp, C) f32, w: (OC, C, K, K), b: (OC,).
    Returns (N, OH, OW, OC) f32 with OH = (Hp - K)//S + 1 etc."""
    N, Hp, Wp, C = xp.shape
    OC, _, K, _ = w.shape
    S = int(stride)
    OH = (Hp - K) // S + 1
    OW = (Wp - K) // S + 1

    # OC padding: lane-dense stores only when the byte inflation is <= 2x.
    ocp_full = _round_up(OC, 128)
    OCP = ocp_full if ocp_full <= 2 * OC else OC

    # Fold kj (and C) onto lanes when the per-tap contraction would otherwise
    # starve the MXU / vreg lanes.
    fold_kj = (K * C <= 256)
    lane = K * C if fold_kj else C        # contraction dim of each MXU dot
    slab_w = OW if fold_kj else Wp        # W extent of one slab
    taps = K if fold_kj else K * K        # dots per output tile

    def vmem_need(toh):
        """Lane/sublane-padded VMEM estimate (double-buffered) for one tile."""
        slab_h = (toh - 1) * S + K
        x_t = slab_h * _round_up(slab_w, 16) * _round_up(lane, 128) * 2   # bf16
        o_t = toh * _round_up(OW, 8) * _round_up(OCP, 128) * 4            # f32
        w_r = taps * _round_up(lane, 16) * _round_up(OCP, 128) * 2        # bf16
        return 2 * (x_t + o_t + w_r) + (64 << 10)

    # ~1024+ MXU rows per grid step, shrunk until it fits a v7x-safe budget.
    TOH = max(1, min(OH, max(8, _cdiv(1024, max(OW, 1)))))
    budget = 40 << 20                      # headroom under v7x's 64 MiB / TC
    while TOH > 1 and vmem_need(TOH) > budget:
        TOH = _cdiv(TOH, 2)
    if N == 1 and OH > 1 and _cdiv(OH, TOH) < 2:
        TOH = _cdiv(OH, 2)                 # v7x: give both TensorCores work
    T = _cdiv(OH, TOH)
    SLAB_H = (TOH - 1) * S + K
    TIH = TOH * S

    x_bf = xp.astype(jnp.bfloat16)
    if fold_kj:
        # Width mini-im2col: lane index becomes kj*C + c for each output col.
        widx = (jnp.arange(OW)[:, None] * S + jnp.arange(K)[None, :]).reshape(-1)
        x_bf = jnp.take(x_bf, widx, axis=2).reshape(N, Hp, OW, K * C)

    # Overlapping H slabs (halo = K - S rows); tail rows clamped, the matching
    # garbage output rows are sliced off below.
    ridx = jnp.arange(T)[:, None] * TIH + jnp.arange(SLAB_H)[None, :]
    ridx = jnp.minimum(ridx, Hp - 1).reshape(-1)
    x_slabs = jnp.take(x_bf, ridx, axis=1).reshape(N * T, SLAB_H, slab_w, lane)

    # Resident weights (bf16) and bias (f32), OC zero-padded to OCP.
    w_t = jnp.transpose(w, (2, 3, 1, 0)).astype(jnp.bfloat16)   # (K, K, C, OC)
    w_t = jnp.pad(w_t, ((0, 0), (0, 0), (0, 0), (0, OCP - OC)))
    b_p = jnp.pad(b, (0, OCP - OC)).reshape(1, OCP).astype(jnp.float32)

    if fold_kj:
        w_t = w_t.reshape(K, K * C, OCP)
        kernel = functools.partial(_conv_folded_kernel, K=K, S=S, TOH=TOH,
                                   OW=OW, KC=K * C, OCP=OCP)
        w_spec = pl.BlockSpec((K, K * C, OCP), lambda n, t: (0, 0, 0))
    else:
        kernel = functools.partial(_conv_taps_kernel, K=K, S=S, TOH=TOH,
                                   OW=OW, C=C, OCP=OCP)
        w_spec = pl.BlockSpec((K, K, C, OCP), lambda n, t: (0, 0, 0, 0))

    flops = 2 * N * T * TOH * OW * K * K * C * OCP
    bytes_accessed = (x_slabs.size * 2 + w_t.size * 2 + b_p.size * 4
                      + N * T * TOH * OW * OCP * 4)
    vmem_limit = int(min(max(2 * vmem_need(TOH), 32 << 20), 48 << 20))

    out = pl.pallas_call(
        kernel,
        out_shape=jax.ShapeDtypeStruct((N, T * TOH, OW, OCP), jnp.float32),
        grid_spec=pltpu.PrefetchScalarGridSpec(
            num_scalar_prefetch=0,
            grid=(N, T),
            in_specs=[
                pl.BlockSpec((1, SLAB_H, slab_w, lane),
                             lambda n, t: (n * T + t, 0, 0, 0)),
                w_spec,
                pl.BlockSpec((1, OCP), lambda n, t: (0, 0)),
            ],
            out_specs=pl.BlockSpec((1, TOH, OW, OCP),
                                   lambda n, t: (n, t, 0, 0)),
        ),
        compiler_params=pltpu.CompilerParams(
            dimension_semantics=("parallel", "parallel"),
            vmem_limit_bytes=vmem_limit),
        cost_estimate=pl.CostEstimate(
            flops=flops, transcendentals=0, bytes_accessed=bytes_accessed),
    )(x_slabs, w_t, b_p)

    # Row-tile tail and OC pad sliced off; XLA fuses this with the caller's
    # NHWC->NCHW transpose.
    return out[:, :OH, :, :OC]


@functools.partial(jax.jit, static_argnames=("kernel_size", "stride"))
def _conv_layer_forward(x, weight, bias, *, kernel_size, stride):
    # x: (N, C, H, W) f32, NCHW like PyTorch.
    P = int(math.floor(kernel_size / 2))
    x_nhwc = jnp.transpose(x, (0, 2, 3, 1))
    if P > 0:
        x_nhwc = jnp.pad(x_nhwc, ((0, 0), (P, P), (P, P), (0, 0)),
                         mode="reflect")
    out = _fused_conv2d(x_nhwc, weight, bias, stride)
    return jnp.transpose(out, (0, 3, 1, 2))             # back to NCHW


# ----------------------------- ConvLayer module ------------------------------

class ConvLayer:
    """JAX/Pallas port of the PyTorch ConvLayer (ReflectionPad2d + Conv2d)."""

    def __init__(self, in_channels, out_channels, kernel_size, stride, key):
        self.in_channels = in_channels
        self.out_channels = out_channels
        self.kernel_size = int(kernel_size)
        self.stride = int(stride)
        self.reflection_padding = int(math.floor(kernel_size / 2))

        # Deterministic PyTorch-Conv2d-like init: uniform(-b, b), b = 1/sqrt(fan_in).
        kw, kb = jax.random.split(key)
        fan_in = in_channels * kernel_size * kernel_size
        bound = 1.0 / math.sqrt(fan_in)
        self.weight = jax.random.uniform(
            kw, (out_channels, in_channels, kernel_size, kernel_size),
            dtype=jnp.float32, minval=-bound, maxval=bound)
        self.bias = jax.random.uniform(
            kb, (out_channels,), dtype=jnp.float32, minval=-bound, maxval=bound)

    def __call__(self, x):
        return _conv_layer_forward(x, self.weight, self.bias,
                                   kernel_size=self.kernel_size,
                                   stride=self.stride)


# ---------------------------------- main -------------------------------------

def _reference(x, layer):
    """Reflection pad + VALID conv via XLA in f32 (matches the PyTorch module)."""
    P, S = layer.reflection_padding, layer.stride
    xp = x
    if P > 0:
        xp = jnp.pad(x, ((0, 0), (0, 0), (P, P), (P, P)), mode="reflect")
    ref = lax.conv_general_dilated(
        xp, layer.weight, window_strides=(S, S), padding="VALID",
        dimension_numbers=("NCHW", "OIHW", "NCHW"),
        precision=lax.Precision.HIGHEST)
    return ref + layer.bias.reshape(1, -1, 1, 1)


if __name__ == "__main__":
    key = jax.random.PRNGKey(0)
    k1x, k1p, k2x, k2p = jax.random.split(key, 4)

    # Config 1 (spec shapes): small C -> kj-folded lane path.
    x1 = jax.random.normal(k1x, (2, 4, 16, 16), dtype=jnp.float32)
    layer1 = ConvLayer(4, 8, 3, 1, key=k1p)
    out1 = jax.block_until_ready(layer1(x1))
    ref1 = _reference(x1, layer1)
    assert out1.shape == ref1.shape, (out1.shape, ref1.shape)
    err1 = float(jnp.max(jnp.abs(out1 - ref1)))
    # bf16 operands (f32 accumulation) loosen the tolerance vs pure f32.
    assert err1 < 5e-2, err1

    # Config 2: large C -> per-tap path, OC padded to 128, odd H exercises the
    # ceil-div row-tile tail and the N=1 two-row-tile split.
    x2 = jax.random.normal(k2x, (1, 128, 9, 9), dtype=jnp.float32)
    layer2 = ConvLayer(128, 64, 3, 1, key=k2p)
    out2 = jax.block_until_ready(layer2(x2))
    ref2 = _reference(x2, layer2)
    assert out2.shape == ref2.shape, (out2.shape, ref2.shape)
    err2 = float(jnp.max(jnp.abs(out2 - ref2)))
    assert err2 < 5e-2, err2

    print("KERNEL_OK")
</pallas_src>

<mosaic_0001>
module attributes {stable_mosaic.version = 11 : i64} {
  func.func @_conv_folded_kernel(%arg0: i32, %arg1: i32, %arg2: memref<1x18x16x12xbf16, #tpu.memory_space<vmem>>, %arg3: memref<3x12x8xbf16, #tpu.memory_space<vmem>>, %arg4: memref<1x8xf32, #tpu.memory_space<vmem>>, %arg5: memref<1x16x16x8xf32, #tpu.memory_space<vmem>>) attributes {dimension_semantics = [#tpu.dimension_semantics<parallel>, #tpu.dimension_semantics<parallel>], iteration_bounds = array<i64: 2, 1>, scalar_prefetch = 0 : i64, scratch_operands = 0 : i64, tpu.core_type = #tpu.core_type<tc>, window_params = [{transform_indices = @transform_0, window_bounds = array<i64: 1, 18, 16, 12>}, {pipeline_mode = #tpu.pipeline_mode<synchronous>, transform_indices = @transform_1, window_bounds = array<i64: 3, 12, 8>}, {pipeline_mode = #tpu.pipeline_mode<synchronous>, transform_indices = @transform_2, window_bounds = array<i64: 1, 8>}, {transform_indices = @transform_3, window_bounds = array<i64: 1, 16, 16, 8>}]} {
    %c0 = arith.constant 0 : index
    %c0_0 = arith.constant 0 : index
    %c0_1 = arith.constant 0 : index
    %c0_2 = arith.constant 0 : index
    %0 = vector.load %arg2[%c0, %c0_0, %c0_1, %c0_2] : memref<1x18x16x12xbf16, #tpu.memory_space<vmem>>, vector<1x16x16x12xbf16>
    %1 = vector.shape_cast %0 : vector<1x16x16x12xbf16> to vector<16x16x12xbf16>
    %2 = vector.shape_cast %1 : vector<16x16x12xbf16> to vector<256x12xbf16>
    %c0_3 = arith.constant 0 : index
    %c0_4 = arith.constant 0 : index
    %c0_5 = arith.constant 0 : index
    %3 = vector.load %arg3[%c0_3, %c0_4, %c0_5] : memref<3x12x8xbf16, #tpu.memory_space<vmem>>, vector<1x12x8xbf16>
    %4 = vector.shape_cast %3 : vector<1x12x8xbf16> to vector<12x8xbf16>
    %cst = arith.constant dense<0.000000e+00> : vector<256x8xf32>
    %5 = tpu.matmul %2, %4, %cst {dimension_numbers = #tpu.dot_dimension_numbers<[1], [0], [0], [1], [0, 0, 1, 1], [], []>} : vector<256x12xbf16>, vector<12x8xbf16>, vector<256x8xf32> -> vector<256x8xf32>
    %c0_6 = arith.constant 0 : index
    %c1 = arith.constant 1 : index
    %c0_7 = arith.constant 0 : index
    %c0_8 = arith.constant 0 : index
    %6 = vector.load %arg2[%c0_6, %c1, %c0_7, %c0_8] : memref<1x18x16x12xbf16, #tpu.memory_space<vmem>>, vector<1x16x16x12xbf16>
    %7 = vector.shape_cast %6 : vector<1x16x16x12xbf16> to vector<16x16x12xbf16>
    %8 = vector.shape_cast %7 : vector<16x16x12xbf16> to vector<256x12xbf16>
    %c1_9 = arith.constant 1 : index
    %c0_10 = arith.constant 0 : index
    %c0_11 = arith.constant 0 : index
    %9 = vector.load %arg3[%c1_9, %c0_10, %c0_11] : memref<3x12x8xbf16, #tpu.memory_space<vmem>>, vector<1x12x8xbf16>
    %10 = vector.shape_cast %9 : vector<1x12x8xbf16> to vector<12x8xbf16>
    %cst_12 = arith.constant dense<0.000000e+00> : vector<256x8xf32>
    %11 = tpu.matmul %8, %10, %cst_12 {dimension_numbers = #tpu.dot_dimension_numbers<[1], [0], [0], [1], [0, 0, 1, 1], [], []>} : vector<256x12xbf16>, vector<12x8xbf16>, vector<256x8xf32> -> vector<256x8xf32>
    %12 = arith.addf %5, %11 : vector<256x8xf32>
    %c0_13 = arith.constant 0 : index
    %c2 = arith.constant 2 : index
    %c0_14 = arith.constant 0 : index
    %c0_15 = arith.constant 0 : index
    %13 = vector.load %arg2[%c0_13, %c2, %c0_14, %c0_15] : memref<1x18x16x12xbf16, #tpu.memory_space<vmem>>, vector<1x16x16x12xbf16>
    %14 = vector.shape_cast %13 : vector<1x16x16x12xbf16> to vector<16x16x12xbf16>
    %15 = vector.shape_cast %14 : vector<16x16x12xbf16> to vector<256x12xbf16>
    %c2_16 = arith.constant 2 : index
    %c0_17 = arith.constant 0 : index
    %c0_18 = arith.constant 0 : index
    %16 = vector.load %arg3[%c2_16, %c0_17, %c0_18] : memref<3x12x8xbf16, #tpu.memory_space<vmem>>, vector<1x12x8xbf16>
    %17 = vector.shape_cast %16 : vector<1x12x8xbf16> to vector<12x8xbf16>
    %cst_19 = arith.constant dense<0.000000e+00> : vector<256x8xf32>
    %18 = tpu.matmul %15, %17, %cst_19 {dimension_numbers = #tpu.dot_dimension_numbers<[1], [0], [0], [1], [0, 0, 1, 1], [], []>} : vector<256x12xbf16>, vector<12x8xbf16>, vector<256x8xf32> -> vector<256x8xf32>
    %19 = arith.addf %12, %18 : vector<256x8xf32>
    %c0_20 = arith.constant 0 : index
    %c0_21 = arith.constant 0 : index
    %20 = vector.load %arg4[%c0_20, %c0_21] : memref<1x8xf32, #tpu.memory_space<vmem>>, vector<1x8xf32>
    %21 = vector.broadcast %20 : vector<1x8xf32> to vector<256x8xf32>
    %22 = arith.addf %19, %21 : vector<256x8xf32>
    %23 = vector.shape_cast %22 : vector<256x8xf32> to vector<1x16x16x8xf32>
    %c0_22 = arith.constant 0 : index
    %c0_23 = arith.constant 0 : index
    %c0_24 = arith.constant 0 : index
    %c0_25 = arith.constant 0 : index
    %24 = vector.load %arg5[%c0_22, %c0_23, %c0_24, %c0_25] : memref<1x16x16x8xf32, #tpu.memory_space<vmem>>, vector<1x16x16x8xf32>
    tpu.vector_store %arg5[%c0_22, %c0_23, %c0_24, %c0_25], %23 {strides = array<i32>} : memref<1x16x16x8xf32, #tpu.memory_space<vmem>>, vector<1x16x16x8xf32>,
    return
  }
  func.func @transform_0(%arg0: i32, %arg1: i32) -> (i32, i32, i32, i32) {
    %c1_i32 = arith.constant 1 : i32
    %0 = arith.muli %arg0, %c1_i32 : i32
    %1 = arith.addi %0, %arg1 : i32
    %c0_i32 = arith.constant 0 : i32
    %c0_i32_0 = arith.constant 0 : i32
    %c0_i32_1 = arith.constant 0 : i32
    %c0_i32_2 = arith.constant 0 : i32
    return %1, %c0_i32, %c0_i32_0, %c0_i32_1 : i32, i32, i32, i32
  }
  func.func @transform_1(%arg0: i32, %arg1: i32) -> (i32, i32, i32) {
    %c0_i32 = arith.constant 0 : i32
    %c0_i32_0 = arith.constant 0 : i32
    %c0_i32_1 = arith.constant 0 : i32
    %c0_i32_2 = arith.constant 0 : i32
    return %c0_i32, %c0_i32_0, %c0_i32_1 : i32, i32, i32
  }
  func.func @transform_2(%arg0: i32, %arg1: i32) -> (i32, i32) {
    %c0_i32 = arith.constant 0 : i32
    %c0_i32_0 = arith.constant 0 : i32
    %c0_i32_1 = arith.constant 0 : i32
    return %c0_i32, %c0_i32_0 : i32, i32
  }
  func.func @transform_3(%arg0: i32, %arg1: i32) -> (i32, i32, i32, i32) {
    %c0_i32 = arith.constant 0 : i32
    %c0_i32_0 = arith.constant 0 : i32
    %c0_i32_1 = arith.constant 0 : i32
    return %arg0, %arg1, %c0_i32, %c0_i32_0 : i32, i32, i32, i32
  }
}

</mosaic_0001>

<llo_original>
// kernel: _conv_layer_forward.1
$region0: #{_conv_layer_forward.1}
  #allocation0 [shape = 'u32[]', space=smem, size = 0x4, offset = 0x4, fixed_abs, tag = 'smem constant byte address 0x4 - core index']
  #allocation1 [shape = 'u32[144,128]{1,0:T(1,128)}', space=vmem, size = 0x12000, scoped, tag = 'internal scratch']
  %s0 = inlined_call_operand.vmem [shape: bf16[2,18,16,12], index: 0, kind: input, shape index: {}]
  %s1 = inlined_call_operand.vmem [shape: bf16[3,12,8], index: 1, kind: input, shape index: {}]
  %s2 = inlined_call_operand.vmem [shape: f32[1,8], index: 2, kind: input, shape index: {}]
  %s3 = inlined_call_operand.vmem [shape: f32[2,16,16,8], index: 3, kind: output, shape index: {}]
  %s4 = sld [smem:[#allocation0]]
  $region45: #{_conv_layer_forward.1} parent=0
    _
  %s6 = ssub.s32 1, %s4
  %s7 = scalar_select 0, %s6, %s4
  loop: start=0, step=1, limit=4
  $region2: #{_conv_layer_forward.1} parent=0 // loop_pre_header
    _
  $region3: #{_conv_layer_forward.1} parent=0 // loop_header
    %s9 = sphi 0, %s13
    %p10 = scmp.ge.s32.totalorder %s9, 4
    %s16 = sphi 0, %s28
    %s17 = sphi 0, %s24
    %s18 = sphi 0, %s16
    %s19 = sphi 0, %s17
    %s20 = sphi 0, %s18
    %s21 = sphi 0, %s19
    %s33 = sphi 0, %s35
    %s36 = sphi 0, %s33
    %s37 = sphi 0, %s36
    %s53 = sphi 0, %s37
    %s57 = sphi 0, %s57
    %s59 = sphi 0, %s57
    %s60 = sphi 0, %s59
    %s74 = sphi 0, %s60
    %s78 = sphi 0, %s78
    %s80 = sphi 0, %s78
    %s81 = sphi 0, %s80
    %s95 = sphi 0, %s81
    %s103 = sphi 0, %s105
    %s106 = sphi 0, %s103
    %s107 = sphi 0, %s106
    %s123 = sphi 0, %s107
  $region4: #{_conv_layer_forward.1} parent=0 // loop_header_branch
    %12 = sbr.rel (%p10) target = $region8
  $region5: #{_conv_layer_forward.1} parent=0 // loop_body
    %s14 = ssub.s32 %s9, 1
    %s15 = ssub.s32 %s9, 2
    %s22 = sadd.s32 1, %s17
    %p23 = scmp.ge.s32.totalorder %s22, 1
    %s24 = scalar_select %p23, 0, %s22
    %s25 = sadd.s32 1, %s16
    %s26 = scalar_select %p23, %s25, %s16
    %p27 = scmp.ge.s32.totalorder %s26, 2
    %s28 = scalar_select %p27, 0, %s26
    %s29 = sadd.s32 %s16, %s17
    %s30 = sadd.s32 %s28, %s24
    %s31 = ssub.s32 %s29, %s30
    %p32 = scmp.eq.s32.totalorder %s31, 0
    %s34 = sadd.s32 %s33, 1
    %s35 = scalar_select %p32, %s33, %s34
    %p38 = pneg %p32
    %p39 = scmp.eq.s32.totalorder %s9, 1
    %p40 = por %p38, %p39
    %p41 = scmp.ne.s32.totalorder %s33, %s36
    %p42 = scmp.eq.s32.totalorder %s9, 0
    %p43 = por %p41, %p42
    %p44 = scmp.ne.s32.totalorder %s33, %s36
    %p45 = scmp.eq.s32.totalorder %s14, 1
    %p46 = por %p44, %p45
    %p47 = scmp.ne.s32.totalorder %s36, %s37
    %p48 = scmp.eq.s32.totalorder %s14, 0
    %p49 = por %p47, %p48
    %p50 = scmp.ne.s32.totalorder %s36, %s37
    %p51 = scmp.eq.s32.totalorder %s15, 1
    %p52 = por %p50, %p51
    %p54 = scmp.ne.s32.totalorder %s37, %s53
    %p55 = scmp.eq.s32.totalorder %s15, 0
    %p56 = por %p54, %p55
    %s58 = sadd.s32 %s57, 1
    %p61 = scmp.eq.s32.totalorder %s9, 1
    %p62 = scmp.ne.s32.totalorder %s57, %s59
    %p63 = scmp.eq.s32.totalorder %s9, 0
    %p64 = por %p62, %p63
    %p65 = scmp.ne.s32.totalorder %s57, %s59
    %p66 = scmp.eq.s32.totalorder %s14, 1
    %p67 = por %p65, %p66
    %p68 = scmp.ne.s32.totalorder %s59, %s60
    %p69 = scmp.eq.s32.totalorder %s14, 0
    %p70 = por %p68, %p69
    %p71 = scmp.ne.s32.totalorder %s59, %s60
    %p72 = scmp.eq.s32.totalorder %s15, 1
    %p73 = por %p71, %p72
    %p75 = scmp.ne.s32.totalorder %s60, %s74
    %p76 = scmp.eq.s32.totalorder %s15, 0
    %p77 = por %p75, %p76
    %s79 = sadd.s32 %s78, 1
    %p82 = scmp.eq.s32.totalorder %s9, 1
    %p83 = scmp.ne.s32.totalorder %s78, %s80
    %p84 = scmp.eq.s32.totalorder %s9, 0
    %p85 = por %p83, %p84
    %p86 = scmp.ne.s32.totalorder %s78, %s80
    %p87 = scmp.eq.s32.totalorder %s14, 1
    %p88 = por %p86, %p87
    %p89 = scmp.ne.s32.totalorder %s80, %s81
    %p90 = scmp.eq.s32.totalorder %s14, 0
    %p91 = por %p89, %p90
    %p92 = scmp.ne.s32.totalorder %s80, %s81
    %p93 = scmp.eq.s32.totalorder %s15, 1
    %p94 = por %p92, %p93
    %p96 = scmp.ne.s32.totalorder %s81, %s95
    %p97 = scmp.eq.s32.totalorder %s15, 0
    %p98 = por %p96, %p97
    %s99 = ssub.s32 %s16, %s28
    %s100 = ssub.s32 %s17, %s24
    %s101 = sor.u32 %s99, %s100
    %p102 = scmp.eq.s32.totalorder %s101, 0
    %s104 = sadd.s32 %s103, 1
    %s105 = scalar_select %p102, %s103, %s104
    %p108 = pneg %p102
    %p109 = scmp.eq.s32.totalorder %s9, 1
    %p110 = por %p108, %p109
    %p111 = scmp.ne.s32.totalorder %s103, %s106
    %p112 = scmp.eq.s32.totalorder %s9, 0
    %p113 = por %p111, %p112
    %p114 = scmp.ne.s32.totalorder %s103, %s106
    %p115 = scmp.eq.s32.totalorder %s14, 1
    %p116 = por %p114, %p115
    %p117 = scmp.ne.s32.totalorder %s106, %s107
    %p118 = scmp.eq.s32.totalorder %s14, 0
    %p119 = por %p117, %p118
    %p120 = scmp.ne.s32.totalorder %s106, %s107
    %p121 = scmp.eq.s32.totalorder %s15, 1
    %p122 = por %p120, %p121
    %p124 = scmp.ne.s32.totalorder %s107, %s123
    %p125 = scmp.eq.s32.totalorder %s15, 0
    %p126 = por %p124, %p125
    %p127 = scmp.le.s32.totalorder 1, %s9
    %p128 = scmp.lt.s32.totalorder %s9, 3
    %p129 = pnand %p127, %p128
    %p130 = pneg %p129
    // Predicated region
    $region9: #{_conv_layer_forward.1} parent=5 // pred_check
      _
    $region10: #{_conv_layer_forward.1} parent=5 // pred_check_branch
      %132 = sbr.rel (%p129) target = $region12
    $region11: #{_conv_layer_forward.1} parent=5 // pred_region
      %s133 = ssub.s32 %s9, 1
      // Predicated region
      $region13: #{_conv_layer_forward.1} parent=11 // pred_check
        %p134 = pneg %p70
      $region14: #{_conv_layer_forward.1} parent=11 // pred_check_branch
        %136 = sbr.rel (%p134) target = $region16
      $region15: #{_conv_layer_forward.1} parent=11 // pred_region
        _
      $region16: #{_conv_layer_forward.1} parent=11 // pred_fallthru
        _
      // Predicated region
      $region17: #{_conv_layer_forward.1} parent=11 // pred_check
        %p137 = pneg %p91
      $region18: #{_conv_layer_forward.1} parent=11 // pred_check_branch
        %139 = sbr.rel (%p137) target = $region20
      $region19: #{_conv_layer_forward.1} parent=11 // pred_region
        _
      $region20: #{_conv_layer_forward.1} parent=11 // pred_fallthru
        _
    $region12: #{_conv_layer_forward.1} parent=5 // pred_fallthru
      _
    %p140 = scmp.lt.s32.totalorder %s9, 2
    // Predicated region
    $region21: #{_conv_layer_forward.1} parent=5 // pred_check
      %p141 = pneg %p140
    $region22: #{_conv_layer_forward.1} parent=5 // pred_check_branch
      %143 = sbr.rel (%p141) target = $region24
    $region23: #{_conv_layer_forward.1} parent=5 // pred_region
      // Predicated region
      $region25: #{_conv_layer_forward.1} parent=23 // pred_check
        %p144 = pneg %p43
      $region26: #{_conv_layer_forward.1} parent=23 // pred_check_branch
        %146 = sbr.rel (%p144) target = $region28
      $region27: #{_conv_layer_forward.1} parent=23 // pred_region
        %s147 = sadd.s32 %s16, %s17
        %p148 = scmp.lt.s32.totalorder %s147, 1
        %s149 = scalar_select %p148, %s147, 1
        %s150 = smul.addr %s149, 36
        %s151 = smul.addr %s150, 4
        %s152 = scalar_lea.vmem %s0, %s151
        %s153 = sadd.s32 %s16, %s17
      $region28: #{_conv_layer_forward.1} parent=23 // pred_fallthru
        _
    $region24: #{_conv_layer_forward.1} parent=5 // pred_fallthru
      _
    %p154 = scmp.le.s32.totalorder 1, %s9
    %p155 = scmp.lt.s32.totalorder %s9, 3
    %p156 = pnand %p154, %p155
    %p157 = pneg %p156
    // Predicated region
    $region29: #{_conv_layer_forward.1} parent=5 // pred_check
      _
    $region30: #{_conv_layer_forward.1} parent=5 // pred_check_branch
      %159 = sbr.rel (%p156) target = $region32
    $region31: #{_conv_layer_forward.1} parent=5 // pred_region
      %s160 = ssub.s32 %s9, 1
      %s161 = sadd.s32 %s18, %s19
      %p162 = scmp.lt.s32.totalorder %s161, 1
      %s163 = scalar_select %p162, %s161, 1
      %s164 = smul.addr %s163, 36
      %s165 = smul.addr %s164, 4
      %s166 = scalar_lea.vmem %s0, %s165
      %p167 = pneg %p49
      %p168 = pneg %p46
      %p169 = pneg %p70
      %p170 = pneg %p67
      %p171 = pneg %p91
      %p172 = pneg %p88
      %p173 = pneg %p119
      %p174 = pneg %p116
      %s175 = smul.u32 16, %s19
      %p176 = scmp.lt.s32.totalorder %s18, 1
      %s177 = scalar_select %p176, %s18, 1
      %p178 = scmp.lt.s32.totalorder %s175, 15
      %s179 = scalar_select %p178, %s175, 15
      %s180 = smul.addr %s179, 2
      %s181 = smul.addr %s177, 32
      %s182 = sadd.s32 %s180, %s181
      %s183 = smul.addr %s182, 8
      %s184 = scalar_lea.vmem %s3, %s183
      %s185 = sadd.s32 %s18, %s19
      %p186 = scmp.lt.s32.totalorder %s185, 1
      %s187 = scalar_select %p186, %s185, 1
      %s188 = smul.addr %s187, 36
      %s189 = smul.addr %s188, 4
      %s190 = scalar_lea.vmem %s0, %s189
      %s191 = sadd.s32 %s18, %s19
      %s192 = smul.u32 16, %s19
      %p193 = scmp.lt.s32.totalorder %s18, 1
      %s194 = scalar_select %p193, %s18, 1
      %p195 = scmp.lt.s32.totalorder %s192, 15
      %s196 = scalar_select %p195, %s192, 15
      %s197 = smul.addr %s196, 2
      %s198 = smul.addr %s194, 32
      %s199 = sadd.s32 %s197, %s198
      %s200 = smul.addr %s199, 8
      %s201 = scalar_lea.vmem %s3, %s200
      %s202 = smul.u32 16, %s19
      %v204 = vld [vmem:[%s190] sm:$0xf]
      %v205 = vld [vmem:[%s190 + $0x4] sm:$0xf]
      %v206 = vld [vmem:[%s190 + $0x8] sm:$0xf]
      %v207 = vld [vmem:[%s190 + $0xc] sm:$0xf]
      %v208 = vld [vmem:[%s190 + $0x10] sm:$0xf]
      %v209 = vld [vmem:[%s190 + $0x14] sm:$0xf]
      %v210 = vld [vmem:[%s190 + $0x18] sm:$0xf]
      %v211 = vld [vmem:[%s190 + $0x1c] sm:$0xf]
      %v212 = vld [vmem:[%s190 + $0x20] sm:$0xf]
      %v213 = vld [vmem:[%s190 + $0x24] sm:$0xf]
      %v214 = vld [vmem:[%s190 + $0x28] sm:$0xf]
      %v215 = vld [vmem:[%s190 + $0x2c] sm:$0xf]
      %v216 = vld [vmem:[%s190 + $0x30] sm:$0xf]
      %v217 = vld [vmem:[%s190 + $0x34] sm:$0xf]
      %v218 = vld [vmem:[%s190 + $0x38] sm:$0xf]
      %v219 = vld [vmem:[%s190 + $0x3c] sm:$0xf]
      %v220 = vld [vmem:[%s190 + $0x40] sm:$0xf]
      %v221 = vld [vmem:[%s190 + $0x44] sm:$0xf]
      %v222 = vld [vmem:[%s190 + $0x48] sm:$0xf]
      %v223 = vld [vmem:[%s190 + $0x4c] sm:$0xf]
      %v224 = vld [vmem:[%s190 + $0x50] sm:$0xf]
      %v225 = vld [vmem:[%s190 + $0x54] sm:$0xf]
      %v226 = vld [vmem:[%s190 + $0x58] sm:$0xf]
      %v227 = vld [vmem:[%s190 + $0x5c] sm:$0xf]
      %v228 = vld [vmem:[%s190 + $0x60] sm:$0xf]
      %v229 = vld [vmem:[%s190 + $0x64] sm:$0xf]
      %v230 = vld [vmem:[%s190 + $0x68] sm:$0xf]
      %v231 = vld [vmem:[%s190 + $0x6c] sm:$0xf]
      %v232 = vld [vmem:[%s190 + $0x70] sm:$0xf]
      %v233 = vld [vmem:[%s190 + $0x74] sm:$0xf]
      %v234 = vld [vmem:[%s190 + $0x78] sm:$0xf]
      %v235 = vld [vmem:[%s190 + $0x7c] sm:$0xf]
      %v236 = vld [vmem:[%s1] sm:$0xf]
      %v237 = vld [vmem:[%s1 + $0x4] sm:$0x3]
      %s238 = scalar_lea.vmem %s190, 8
      %v239 = vld [vmem:[%s238] sm:$0xf]
      %v240 = vld [vmem:[%s238 + $0x4] sm:$0xf]
      %v241 = vld [vmem:[%s238 + $0x8] sm:$0xf]
      %v242 = vld [vmem:[%s238 + $0xc] sm:$0xf]
      %v243 = vld [vmem:[%s238 + $0x10] sm:$0xf]
      %v244 = vld [vmem:[%s238 + $0x14] sm:$0xf]
      %v245 = vld [vmem:[%s238 + $0x18] sm:$0xf]
      %v246 = vld [vmem:[%s238 + $0x1c] sm:$0xf]
      %v247 = vld [vmem:[%s238 + $0x20] sm:$0xf]
      %v248 = vld [vmem:[%s238 + $0x24] sm:$0xf]
      %v249 = vld [vmem:[%s238 + $0x28] sm:$0xf]
      %v250 = vld [vmem:[%s238 + $0x2c] sm:$0xf]
      %v251 = vld [vmem:[%s238 + $0x30] sm:$0xf]
      %v252 = vld [vmem:[%s238 + $0x34] sm:$0xf]
      %v253 = vld [vmem:[%s238 + $0x38] sm:$0xf]
      %v254 = vld [vmem:[%s238 + $0x3c] sm:$0xf]
      %v255 = vld [vmem:[%s238 + $0x40] sm:$0xf]
      %v256 = vld [vmem:[%s238 + $0x44] sm:$0xf]
      %v257 = vld [vmem:[%s238 + $0x48] sm:$0xf]
      %v258 = vld [vmem:[%s238 + $0x4c] sm:$0xf]
      %v259 = vld [vmem:[%s238 + $0x50] sm:$0xf]
      %v260 = vld [vmem:[%s238 + $0x54] sm:$0xf]
      %v261 = vld [vmem:[%s238 + $0x58] sm:$0xf]
      %v262 = vld [vmem:[%s238 + $0x5c] sm:$0xf]
      %v263 = vld [vmem:[%s238 + $0x60] sm:$0xf]
      %v264 = vld [vmem:[%s238 + $0x64] sm:$0xf]
      %v265 = vld [vmem:[%s238 + $0x68] sm:$0xf]
      %v266 = vld [vmem:[%s238 + $0x6c] sm:$0xf]
      %v267 = vld [vmem:[%s238 + $0x70] sm:$0xf]
      %v268 = vld [vmem:[%s238 + $0x74] sm:$0xf]
      %v269 = vld [vmem:[%s238 + $0x78] sm:$0xf]
      %v270 = vld [vmem:[%s238 + $0x7c] sm:$0xf]
      %s271 = scalar_lea.vmem %s1, 8
      %v272 = vld [vmem:[%s271] sm:$0xf]
      %v273 = vld [vmem:[%s271 + $0x4] sm:$0x3]
      %v306 = vunpack.c.l.b16 %v239
      %v307 = vunpack.c.l.b16 %v240
      %v308 = vunpack.c.l.b16 %v241
      %v309 = vunpack.c.l.b16 %v242
      %v310 = vunpack.c.l.b16 %v243
      %v311 = vunpack.c.l.b16 %v244
      %v312 = vunpack.c.l.b16 %v245
      %v313 = vunpack.c.l.b16 %v246
      %v314 = vunpack.c.l.b16 %v247
      %v315 = vunpack.c.l.b16 %v248
      %v316 = vunpack.c.l.b16 %v249
      %v317 = vunpack.c.l.b16 %v250
      %v318 = vunpack.c.l.b16 %v251
      %v319 = vunpack.c.l.b16 %v252
      %v320 = vunpack.c.l.b16 %v253
      %v321 = vunpack.c.l.b16 %v254
      %v322 = vunpack.c.l.b16 %v255
      %v323 = vunpack.c.l.b16 %v256
      %v324 = vunpack.c.l.b16 %v257
      %v325 = vunpack.c.l.b16 %v258
      %v326 = vunpack.c.l.b16 %v259
      %v327 = vunpack.c.l.b16 %v260
      %v328 = vunpack.c.l.b16 %v261
      %v329 = vunpack.c.l.b16 %v262
      %v330 = vunpack.c.l.b16 %v263
      %v331 = vunpack.c.l.b16 %v264
      %v332 = vunpack.c.l.b16 %v265
      %v333 = vunpack.c.l.b16 %v266
      %v334 = vunpack.c.l.b16 %v267
      %v335 = vunpack.c.l.b16 %v268
      %v336 = vunpack.c.l.b16 %v269
      %v337 = vunpack.c.l.b16 %v270
      %v338 = vpack.c.b16 %v307, %v306
      %v339 = vpack.c.b16 %v309, %v308
      %v340 = vpack.c.b16 %v311, %v310
      %v341 = vpack.c.b16 %v313, %v312
      %v342 = vpack.c.b16 %v315, %v314
      %v343 = vpack.c.b16 %v317, %v316
      %v344 = vpack.c.b16 %v319, %v318
      %v345 = vpack.c.b16 %v321, %v320
      %v346 = vpack.c.b16 %v323, %v322
      %v347 = vpack.c.b16 %v325, %v324
      %v348 = vpack.c.b16 %v327, %v326
      %v349 = vpack.c.b16 %v329, %v328
      %v350 = vpack.c.b16 %v331, %v330
      %v351 = vpack.c.b16 %v333, %v332
      %v352 = vpack.c.b16 %v335, %v334
      %v353 = vpack.c.b16 %v337, %v336
      %v356 = vunpack.c.l.b16 %v272
      %v357 = vunpack.c.l.b16 %v273
      %v358 = vpack.c.b16 %v357, %v356
      %vm359 = vcmask 97280
      %v361 = vsel %vm359, %v338, 0
      %v364 = vsel %vm359, %v339, 0
      %v367 = vsel %vm359, %v340, 0
      %v370 = vsel %vm359, %v341, 0
      %v373 = vsel %vm359, %v342, 0
      %v376 = vsel %vm359, %v343, 0
      %v379 = vsel %vm359, %v344, 0
      %v382 = vsel %vm359, %v345, 0
      %v385 = vsel %vm359, %v346, 0
      %v388 = vsel %vm359, %v347, 0
      %v391 = vsel %vm359, %v348, 0
      %v394 = vsel %vm359, %v349, 0
      %v397 = vsel %vm359, %v350, 0
      %v400 = vsel %vm359, %v351, 0
      %v403 = vsel %vm359, %v352, 0
      %v406 = vsel %vm359, %v353, 0
      %vm408 = vcmask 1045504
      %v410 = vsel %vm408, %v358, 0
      %412 = vmatprep.subr.bf16.mxu0 0
      %413 = vmatpush1.bf16.msra.mxu0 %v410
      %414 = vmatprep.subr.bf16.mxu0 0
      %415 = vmatpush1.bf16.msra.mxu0 0
      %416 = vmatprep.subr.bf16.mxu0 0
      %417 = vmatpush1.bf16.msra.mxu0 0
      %418 = vmatprep.subr.bf16.mxu0 0
      %419 = vmatpush1.bf16.msra.mxu0 0
      %420 = vmatprep.subr.bf16.mxu0 0
      %421 = vmatpush1.bf16.msra.mxu0 0
      %422 = vmatprep.subr.bf16.mxu0 0
      %423 = vmatpush1.bf16.msra.mxu0 0
      %424 = vmatprep.subr.bf16.mxu0 0
      %425 = vmatpush1.bf16.msra.mxu0 0
      %426 = vmatprep.subr.bf16.mxu0 0
      %427 = vmatpush1.bf16.msra.mxu0 0
      %428 = vmatprep.subr.bf16.mxu0 0
      %429 = vmatpush1.bf16.msra.mxu0 0
      %430 = vmatprep.subr.bf16.mxu0 0
      %431 = vmatpush1.bf16.msra.mxu0 0
      %432 = vmatprep.subr.bf16.mxu0 0
      %433 = vmatpush1.bf16.msra.mxu0 0
      %434 = vmatprep.subr.bf16.mxu0 0
      %435 = vmatpush1.bf16.msra.mxu0 0
      %436 = vmatprep.subr.bf16.mxu0 0
      %437 = vmatpush1.bf16.msra.mxu0 0
      %438 = vmatprep.subr.bf16.mxu0 0
      %439 = vmatpush1.bf16.msra.mxu0 0
      %440 = vmatprep.subr.bf16.mxu0 0
      %441 = vmatpush1.bf16.msra.mxu0 0
      %442 = vmatprep.subr.bf16.mxu0 0
      %443 = vmatpush1.bf16.msra.mxu0 0
      %444 = vmatprep.mubr.bf16.mxu0 0
      %445 = vmatmul.mubr.bf16.gmra.mrb[0].mxu0 %v361
      %v446 = vpop.f32.mrb[0].mxu0
      %v447 = vadd.f32 0.0, %v446
      %v448 = vpop.f32.mrb[0].mxu0
      %v449 = vpop.f32.mrb[0].mxu0
      %v450 = vadd.f32 0.0, %v449
      %v451 = vpop.f32.mrb[0].mxu0
      %452 = vmatprep.mubr.bf16.mxu0 0
      %453 = vmatmul.mubr.bf16.gmra.mrb[0].mxu0 %v364
      %v454 = vpop.f32.mrb[0].mxu0
      %v455 = vadd.f32 0.0, %v454
      %v456 = vpop.f32.mrb[0].mxu0
      %v457 = vpop.f32.mrb[0].mxu0
      %v458 = vadd.f32 0.0, %v457
      %v459 = vpop.f32.mrb[0].mxu0
      %460 = vmatprep.mubr.bf16.mxu0 0
      %461 = vmatmul.mubr.bf16.gmra.mrb[0].mxu0 %v367
      %v462 = vpop.f32.mrb[0].mxu0
      %v463 = vadd.f32 0.0, %v462
      %v464 = vpop.f32.mrb[0].mxu0
      %v465 = vpop.f32.mrb[0].mxu0
      %v466 = vadd.f32 0.0, %v465
      %v467 = vpop.f32.mrb[0].mxu0
      %468 = vmatprep.mubr.bf16.mxu0 0
      %469 = vmatmul.mubr.bf16.gmra.mrb[0].mxu0 %v370
      %v470 = vpop.f32.mrb[0].mxu0
      %v471 = vadd.f32 0.0, %v470
      %v472 = vpop.f32.mrb[0].mxu0
      %v473 = vpop.f32.mrb[0].mxu0
      %v474 = vadd.f32 0.0, %v473
      %v475 = vpop.f32.mrb[0].mxu0
      %476 = vmatprep.mubr.bf16.mxu0 0
      %477 = vmatmul.mubr.bf16.gmra.mrb[0].mxu0 %v373
      %v478 = vpop.f32.mrb[0].mxu0
      %v479 = vadd.f32 0.0, %v478
      %v480 = vpop.f32.mrb[0].mxu0
      %v481 = vpop.f32.mrb[0].mxu0
      %v482 = vadd.f32 0.0, %v481
      %v483 = vpop.f32.mrb[0].mxu0
      %484 = vmatprep.mubr.bf16.mxu0 0
      %485 = vmatmul.mubr.bf16.gmra.mrb[0].mxu0 %v376
      %v486 = vpop.f32.mrb[0].mxu0
      %v487 = vadd.f32 0.0, %v486
      %v488 = vpop.f32.mrb[0].mxu0
      %v489 = vpop.f32.mrb[0].mxu0
      %v490 = vadd.f32 0.0, %v489
      %v491 = vpop.f32.mrb[0].mxu0
      %492 = vmatprep.mubr.bf16.mxu0 0
      %493 = vmatmul.mubr.bf16.gmra.mrb[0].mxu0 %v379
      %v494 = vpop.f32.mrb[0].mxu0
      %v495 = vadd.f32 0.0, %v494
      %v496 = vpop.f32.mrb[0].mxu0
      %v497 = vpop.f32.mrb[0].mxu0
      %v498 = vadd.f32 0.0, %v497
      %v499 = vpop.f32.mrb[0].mxu0
      %500 = vmatprep.mubr.bf16.mxu0 0
      %501 = vmatmul.mubr.bf16.gmra.mrb[0].mxu0 %v382
      %v502 = vpop.f32.mrb[0].mxu0
      %v503 = vadd.f32 0.0, %v502
      %v504 = vpop.f32.mrb[0].mxu0
      %v505 = vpop.f32.mrb[0].mxu0
      %v506 = vadd.f32 0.0, %v505
      %v507 = vpop.f32.mrb[0].mxu0
      %508 = vmatprep.mubr.bf16.mxu0 0
      %509 = vmatmul.mubr.bf16.gmra.mrb[0].mxu0 %v385
      %v510 = vpop.f32.mrb[0].mxu0
      %v511 = vadd.f32 0.0, %v510
      %v512 = vpop.f32.mrb[0].mxu0
      %v513 = vpop.f32.mrb[0].mxu0
      %v514 = vadd.f32 0.0, %v513
      %v515 = vpop.f32.mrb[0].mxu0
      %516 = vmatprep.mubr.bf16.mxu0 0
      %517 = vmatmul.mubr.bf16.gmra.mrb[0].mxu0 %v388
      %v518 = vpop.f32.mrb[0].mxu0
      %v519 = vadd.f32 0.0, %v518
      %v520 = vpop.f32.mrb[0].mxu0
      %v521 = vpop.f32.mrb[0].mxu0
      %v522 = vadd.f32 0.0, %v521
      %v523 = vpop.f32.mrb[0].mxu0
      %524 = vmatprep.mubr.bf16.mxu0 0
      %525 = vmatmul.mubr.bf16.gmra.mrb[0].mxu0 %v391
      %v526 = vpop.f32.mrb[0].mxu0
      %v527 = vadd.f32 0.0, %v526
      %v528 = vpop.f32.mrb[0].mxu0
      %v529 = vpop.f32.mrb[0].mxu0
      %v530 = vadd.f32 0.0, %v529
      %v531 = vpop.f32.mrb[0].mxu0
      %532 = vmatprep.mubr.bf16.mxu0 0
      %533 = vmatmul.mubr.bf16.gmra.mrb[0].mxu0 %v394
      %v534 = vpop.f32.mrb[0].mxu0
      %v535 = vadd.f32 0.0, %v534
      %v536 = vpop.f32.mrb[0].mxu0
      %v537 = vpop.f32.mrb[0].mxu0
      %v538 = vadd.f32 0.0, %v537
      %v539 = vpop.f32.mrb[0].mxu0
      %540 = vmatprep.mubr.bf16.mxu0 0
      %541 = vmatmul.mubr.bf16.gmra.mrb[0].mxu0 %v397
      %v542 = vpop.f32.mrb[0].mxu0
      %v543 = vadd.f32 0.0, %v542
      %v544 = vpop.f32.mrb[0].mxu0
      %v545 = vpop.f32.mrb[0].mxu0
      %v546 = vadd.f32 0.0, %v545
      %v547 = vpop.f32.mrb[0].mxu0
      %548 = vmatprep.mubr.bf16.mxu0 0
      %549 = vmatmul.mubr.bf16.gmra.mrb[0].mxu0 %v400
      %v550 = vpop.f32.mrb[0].mxu0
      %v551 = vadd.f32 0.0, %v550
      %v552 = vpop.f32.mrb[0].mxu0
      %v553 = vpop.f32.mrb[0].mxu0
      %v554 = vadd.f32 0.0, %v553
      %v555 = vpop.f32.mrb[0].mxu0
      %556 = vmatprep.mubr.bf16.mxu0 0
      %557 = vmatmul.mubr.bf16.gmra.mrb[0].mxu0 %v403
      %v558 = vpop.f32.mrb[0].mxu0
      %v559 = vadd.f32 0.0, %v558
      %v560 = vpop.f32.mrb[0].mxu0
      %v561 = vpop.f32.mrb[0].mxu0
      %v562 = vadd.f32 0.0, %v561
      %v563 = vpop.f32.mrb[0].mxu0
      %564 = vmatprep.mubr.bf16.mxu0 0
      %565 = vmatmul.mubr.bf16.gmra.mrb[0].mxu0 %v406
      %v566 = vpop.f32.mrb[0].mxu0
      %v567 = vadd.f32 0.0, %v566
      %v568 = vpop.f32.mrb[0].mxu0
      %v569 = vpop.f32.mrb[0].mxu0
      %v570 = vadd.f32 0.0, %v569
      %v571 = vpop.f32.mrb[0].mxu0
      %572 = vdwg.mxu0
      %v605 = vunpack.c.l.b16 %v204
      %v606 = vunpack.c.l.b16 %v205
      %v607 = vunpack.c.l.b16 %v206
      %v608 = vunpack.c.l.b16 %v207
      %v609 = vunpack.c.l.b16 %v208
      %v610 = vunpack.c.l.b16 %v209
      %v611 = vunpack.c.l.b16 %v210
      %v612 = vunpack.c.l.b16 %v211
      %v613 = vunpack.c.l.b16 %v212
      %v614 = vunpack.c.l.b16 %v213
      %v615 = vunpack.c.l.b16 %v214
      %v616 = vunpack.c.l.b16 %v215
      %v617 = vunpack.c.l.b16 %v216
      %v618 = vunpack.c.l.b16 %v217
      %v619 = vunpack.c.l.b16 %v218
      %v620 = vunpack.c.l.b16 %v219
      %v621 = vunpack.c.l.b16 %v220
      %v622 = vunpack.c.l.b16 %v221
      %v623 = vunpack.c.l.b16 %v222
      %v624 = vunpack.c.l.b16 %v223
      %v625 = vunpack.c.l.b16 %v224
      %v626 = vunpack.c.l.b16 %v225
      %v627 = vunpack.c.l.b16 %v226
      %v628 = vunpack.c.l.b16 %v227
      %v629 = vunpack.c.l.b16 %v228
      %v630 = vunpack.c.l.b16 %v229
      %v631 = vunpack.c.l.b16 %v230
      %v632 = vunpack.c.l.b16 %v231
      %v633 = vunpack.c.l.b16 %v232
      %v634 = vunpack.c.l.b16 %v233
      %v635 = vunpack.c.l.b16 %v234
      %v636 = vunpack.c.l.b16 %v235
      %v637 = vpack.c.b16 %v606, %v605
      %v638 = vpack.c.b16 %v608, %v607
      %v639 = vpack.c.b16 %v610, %v609
      %v640 = vpack.c.b16 %v612, %v611
      %v641 = vpack.c.b16 %v614, %v613
      %v642 = vpack.c.b16 %v616, %v615
      %v643 = vpack.c.b16 %v618, %v617
      %v644 = vpack.c.b16 %v620, %v619
      %v645 = vpack.c.b16 %v622, %v621
      %v646 = vpack.c.b16 %v624, %v623
      %v647 = vpack.c.b16 %v626, %v625
      %v648 = vpack.c.b16 %v628, %v627
      %v649 = vpack.c.b16 %v630, %v629
      %v650 = vpack.c.b16 %v632, %v631
      %v651 = vpack.c.b16 %v634, %v633
      %v652 = vpack.c.b16 %v636, %v635
      %v655 = vunpack.c.l.b16 %v236
      %v656 = vunpack.c.l.b16 %v237
      %v657 = vpack.c.b16 %v656, %v655
      %v659 = vsel %vm359, %v637, 0
      %v662 = vsel %vm359, %v638, 0
      %v665 = vsel %vm359, %v639, 0
      %v668 = vsel %vm359, %v640, 0
      %v671 = vsel %vm359, %v641, 0
      %v674 = vsel %vm359, %v642, 0
      %v677 = vsel %vm359, %v643, 0
      %v680 = vsel %vm359, %v644, 0
      %v683 = vsel %vm359, %v645, 0
      %v686 = vsel %vm359, %v646, 0
      %v689 = vsel %vm359, %v647, 0
      %v692 = vsel %vm359, %v648, 0
      %v695 = vsel %vm359, %v649, 0
      %v698 = vsel %vm359, %v650, 0
      %v701 = vsel %vm359, %v651, 0
      %v704 = vsel %vm359, %v652, 0
      %v707 = vsel %vm408, %v657, 0
      %709 = vmatprep.subr.bf16.mxu0 0
      %710 = vmatpush1.bf16.msra.mxu0 %v707
      %711 = vmatprep.subr.bf16.mxu0 0
      %712 = vmatpush1.bf16.msra.mxu0 0
      %713 = vmatprep.subr.bf16.mxu0 0
      %714 = vmatpush1.bf16.msra.mxu0 0
      %715 = vmatprep.subr.bf16.mxu0 0
      %716 = vmatpush1.bf16.msra.mxu0 0
      %717 = vmatprep.subr.bf16.mxu0 0
      %718 = vmatpush1.bf16.msra.mxu0 0
      %719 = vmatprep.subr.bf16.mxu0 0
      %720 = vmatpush1.bf16.msra.mxu0 0
      %721 = vmatprep.subr.bf16.mxu0 0
      %722 = vmatpush1.bf16.msra.mxu0 0
      %723 = vmatprep.subr.bf16.mxu0 0
      %724 = vmatpush1.bf16.msra.mxu0 0
      %725 = vmatprep.subr.bf16.mxu0 0
      %726 = vmatpush1.bf16.msra.mxu0 0
      %727 = vmatprep.subr.bf16.mxu0 0
      %728 = vmatpush1.bf16.msra.mxu0 0
      %729 = vmatprep.subr.bf16.mxu0 0
      %730 = vmatpush1.bf16.msra.mxu0 0
      %731 = vmatprep.subr.bf16.mxu0 0
      %732 = vmatpush1.bf16.msra.mxu0 0
      %733 = vmatprep.subr.bf16.mxu0 0
      %734 = vmatpush1.bf16.msra.mxu0 0
      %735 = vmatprep.subr.bf16.mxu0 0
      %736 = vmatpush1.bf16.msra.mxu0 0
      %737 = vmatprep.subr.bf16.mxu0 0
      %738 = vmatpush1.bf16.msra.mxu0 0
      %739 = vmatprep.subr.bf16.mxu0 0
      %740 = vmatpush1.bf16.msra.mxu0 0
      %741 = vmatprep.mubr.bf16.mxu0 0
      %742 = vmatmul.mubr.bf16.gmra.mrb[0].mxu0 %v659
      %v743 = vpop.f32.mrb[0].mxu0
      %v744 = vadd.f32 %v447, %v743
      %v745 = vpop.f32.mrb[0].mxu0
      %v746 = vpop.f32.mrb[0].mxu0
      %v747 = vadd.f32 %v450, %v746
      %v748 = vpop.f32.mrb[0].mxu0
      %749 = vmatprep.mubr.bf16.mxu0 0
      %750 = vmatmul.mubr.bf16.gmra.mrb[0].mxu0 %v662
      %v751 = vpop.f32.mrb[0].mxu0
      %v752 = vadd.f32 %v455, %v751
      %v753 = vpop.f32.mrb[0].mxu0
      %v754 = vpop.f32.mrb[0].mxu0
      %v755 = vadd.f32 %v458, %v754
      %v756 = vpop.f32.mrb[0].mxu0
      %757 = vmatprep.mubr.bf16.mxu0 0
      %758 = vmatmul.mubr.bf16.gmra.mrb[0].mxu0 %v665
      %v759 = vpop.f32.mrb[0].mxu0
      %v760 = vadd.f32 %v463, %v759
      %v761 = vpop.f32.mrb[0].mxu0
      %v762 = vpop.f32.mrb[0].mxu0
      %v763 = vadd.f32 %v466, %v762
      %v764 = vpop.f32.mrb[0].mxu0
      %765 = vmatprep.mubr.bf16.mxu0 0
      %766 = vmatmul.mubr.bf16.gmra.mrb[0].mxu0 %v668
      %v767 = vpop.f32.mrb[0].mxu0
      %v768 = vadd.f32 %v471, %v767
      %v769 = vpop.f32.mrb[0].mxu0
      %v770 = vpop.f32.mrb[0].mxu0
      %v771 = vadd.f32 %v474, %v770
      %v772 = vpop.f32.mrb[0].mxu0
      %773 = vmatprep.mubr.bf16.mxu0 0
      %774 = vmatmul.mubr.bf16.gmra.mrb[0].mxu0 %v671
      %v775 = vpop.f32.mrb[0].mxu0
      %v776 = vadd.f32 %v479, %v775
      %v777 = vpop.f32.mrb[0].mxu0
      %v778 = vpop.f32.mrb[0].mxu0
      %v779 = vadd.f32 %v482, %v778
      %v780 = vpop.f32.mrb[0].mxu0
      %781 = vmatprep.mubr.bf16.mxu0 0
      %782 = vmatmul.mubr.bf16.gmra.mrb[0].mxu0 %v674
      %v783 = vpop.f32.mrb[0].mxu0
      %v784 = vadd.f32 %v487, %v783
      %v785 = vpop.f32.mrb[0].mxu0
      %v786 = vpop.f32.mrb[0].mxu0
      %v787 = vadd.f32 %v490, %v786
      %v788 = vpop.f32.mrb[0].mxu0
      %789 = vmatprep.mubr.bf16.mxu0 0
      %790 = vmatmul.mubr.bf16.gmra.mrb[0].mxu0 %v677
      %v791 = vpop.f32.mrb[0].mxu0
      %v792 = vadd.f32 %v495, %v791
      %v793 = vpop.f32.mrb[0].mxu0
      %v794 = vpop.f32.mrb[0].mxu0
      %v795 = vadd.f32 %v498, %v794
      %v796 = vpop.f32.mrb[0].mxu0
      %797 = vmatprep.mubr.bf16.mxu0 0
      %798 = vmatmul.mubr.bf16.gmra.mrb[0].mxu0 %v680
      %v799 = vpop.f32.mrb[0].mxu0
      %v800 = vadd.f32 %v503, %v799
      %v801 = vpop.f32.mrb[0].mxu0
      %v802 = vpop.f32.mrb[0].mxu0
      %v803 = vadd.f32 %v506, %v802
      %v804 = vpop.f32.mrb[0].mxu0
      %805 = vmatprep.mubr.bf16.mxu0 0
      %806 = vmatmul.mubr.bf16.gmra.mrb[0].mxu0 %v683
      %v807 = vpop.f32.mrb[0].mxu0
      %v808 = vadd.f32 %v511, %v807
      %v809 = vpop.f32.mrb[0].mxu0
      %v810 = vpop.f32.mrb[0].mxu0
      %v811 = vadd.f32 %v514, %v810
      %v812 = vpop.f32.mrb[0].mxu0
      %813 = vmatprep.mubr.bf16.mxu0 0
      %814 = vmatmul.mubr.bf16.gmra.mrb[0].mxu0 %v686
      %v815 = vpop.f32.mrb[0].mxu0
      %v816 = vadd.f32 %v519, %v815
      %v817 = vpop.f32.mrb[0].mxu0
      %v818 = vpop.f32.mrb[0].mxu0
      %v819 = vadd.f32 %v522, %v818
      %v820 = vpop.f32.mrb[0].mxu0
      %821 = vmatprep.mubr.bf16.mxu0 0
      %822 = vmatmul.mubr.bf16.gmra.mrb[0].mxu0 %v689
      %v823 = vpop.f32.mrb[0].mxu0
      %v824 = vadd.f32 %v527, %v823
      %v825 = vpop.f32.mrb[0].mxu0
      %v826 = vpop.f32.mrb[0].mxu0
      %v827 = vadd.f32 %v530, %v826
      %v828 = vpop.f32.mrb[0].mxu0
      %829 = vmatprep.mubr.bf16.mxu0 0
      %830 = vmatmul.mubr.bf16.gmra.mrb[0].mxu0 %v692
      %v831 = vpop.f32.mrb[0].mxu0
      %v832 = vadd.f32 %v535, %v831
      %v833 = vpop.f32.mrb[0].mxu0
      %v834 = vpop.f32.mrb[0].mxu0
      %v835 = vadd.f32 %v538, %v834
      %v836 = vpop.f32.mrb[0].mxu0
      %837 = vmatprep.mubr.bf16.mxu0 0
      %838 = vmatmul.mubr.bf16.gmra.mrb[0].mxu0 %v695
      %v839 = vpop.f32.mrb[0].mxu0
      %v840 = vadd.f32 %v543, %v839
      %v841 = vpop.f32.mrb[0].mxu0
      %v842 = vpop.f32.mrb[0].mxu0
      %v843 = vadd.f32 %v546, %v842
      %v844 = vpop.f32.mrb[0].mxu0
      %845 = vmatprep.mubr.bf16.mxu0 0
      %846 = vmatmul.mubr.bf16.gmra.mrb[0].mxu0 %v698
      %v847 = vpop.f32.mrb[0].mxu0
      %v848 = vadd.f32 %v551, %v847
      %v849 = vpop.f32.mrb[0].mxu0
      %v850 = vpop.f32.mrb[0].mxu0
      %v851 = vadd.f32 %v554, %v850
      %v852 = vpop.f32.mrb[0].mxu0
      %853 = vmatprep.mubr.bf16.mxu0 0
      %854 = vmatmul.mubr.bf16.gmra.mrb[0].mxu0 %v701
      %v855 = vpop.f32.mrb[0].mxu0
      %v856 = vadd.f32 %v559, %v855
      %v857 = vpop.f32.mrb[0].mxu0
      %v858 = vpop.f32.mrb[0].mxu0
      %v859 = vadd.f32 %v562, %v858
      %v860 = vpop.f32.mrb[0].mxu0
      %861 = vmatprep.mubr.bf16.mxu0 0
      %862 = vmatmul.mubr.bf16.gmra.mrb[0].mxu0 %v704
      %v863 = vpop.f32.mrb[0].mxu0
      %v864 = vadd.f32 %v567, %v863
      %v865 = vpop.f32.mrb[0].mxu0
      %v866 = vpop.f32.mrb[0].mxu0
      %v867 = vadd.f32 %v570, %v866
      %v868 = vpop.f32.mrb[0].mxu0
      %869 = vdwg.mxu0
      %s870 = scalar_lea.vmem %s190, 16
      %v871 = vld [vmem:[%s870] sm:$0xf]
      %v872 = vld [vmem:[%s870 + $0x4] sm:$0xf]
      %v873 = vld [vmem:[%s870 + $0x8] sm:$0xf]
      %v874 = vld [vmem:[%s870 + $0xc] sm:$0xf]
      %v875 = vld [vmem:[%s870 + $0x10] sm:$0xf]
      %v876 = vld [vmem:[%s870 + $0x14] sm:$0xf]
      %v877 = vld [vmem:[%s870 + $0x18] sm:$0xf]
      %v878 = vld [vmem:[%s870 + $0x1c] sm:$0xf]
      %v879 = vld [vmem:[%s870 + $0x20] sm:$0xf]
      %v880 = vld [vmem:[%s870 + $0x24] sm:$0xf]
      %v881 = vld [vmem:[%s870 + $0x28] sm:$0xf]
      %v882 = vld [vmem:[%s870 + $0x2c] sm:$0xf]
      %v883 = vld [vmem:[%s870 + $0x30] sm:$0xf]
      %v884 = vld [vmem:[%s870 + $0x34] sm:$0xf]
      %v885 = vld [vmem:[%s870 + $0x38] sm:$0xf]
      %v886 = vld [vmem:[%s870 + $0x3c] sm:$0xf]
      %v887 = vld [vmem:[%s870 + $0x40] sm:$0xf]
      %v888 = vld [vmem:[%s870 + $0x44] sm:$0xf]
      %v889 = vld [vmem:[%s870 + $0x48] sm:$0xf]
      %v890 = vld [vmem:[%s870 + $0x4c] sm:$0xf]
      %v891 = vld [vmem:[%s870 + $0x50] sm:$0xf]
      %v892 = vld [vmem:[%s870 + $0x54] sm:$0xf]
      %v893 = vld [vmem:[%s870 + $0x58] sm:$0xf]
      %v894 = vld [vmem:[%s870 + $0x5c] sm:$0xf]
      %v895 = vld [vmem:[%s870 + $0x60] sm:$0xf]
      %v896 = vld [vmem:[%s870 + $0x64] sm:$0xf]
      %v897 = vld [vmem:[%s870 + $0x68] sm:$0xf]
      %v898 = vld [vmem:[%s870 + $0x6c] sm:$0xf]
      %v899 = vld [vmem:[%s870 + $0x70] sm:$0xf]
      %v900 = vld [vmem:[%s870 + $0x74] sm:$0xf]
      %v901 = vld [vmem:[%s870 + $0x78] sm:$0xf]
      %v902 = vld [vmem:[%s870 + $0x7c] sm:$0xf]
      %s903 = scalar_lea.vmem %s1, 16
      %v904 = vld [vmem:[%s903] sm:$0xf]
      %v905 = vld [vmem:[%s903 + $0x4] sm:$0x3]
      %v938 = vunpack.c.l.b16 %v871
      %v939 = vunpack.c.l.b16 %v872
      %v940 = vunpack.c.l.b16 %v873
      %v941 = vunpack.c.l.b16 %v874
      %v942 = vunpack.c.l.b16 %v875
      %v943 = vunpack.c.l.b16 %v876
      %v944 = vunpack.c.l.b16 %v877
      %v945 = vunpack.c.l.b16 %v878
      %v946 = vunpack.c.l.b16 %v879
      %v947 = vunpack.c.l.b16 %v880
      %v948 = vunpack.c.l.b16 %v881
      %v949 = vunpack.c.l.b16 %v882
      %v950 = vunpack.c.l.b16 %v883
      %v951 = vunpack.c.l.b16 %v884
      %v952 = vunpack.c.l.b16 %v885
      %v953 = vunpack.c.l.b16 %v886
      %v954 = vunpack.c.l.b16 %v887
      %v955 = vunpack.c.l.b16 %v888
      %v956 = vunpack.c.l.b16 %v889
      %v957 = vunpack.c.l.b16 %v890
      %v958 = vunpack.c.l.b16 %v891
      %v959 = vunpack.c.l.b16 %v892
      %v960 = vunpack.c.l.b16 %v893
      %v961 = vunpack.c.l.b16 %v894
      %v962 = vunpack.c.l.b16 %v895
      %v963 = vunpack.c.l.b16 %v896
      %v964 = vunpack.c.l.b16 %v897
      %v965 = vunpack.c.l.b16 %v898
      %v966 = vunpack.c.l.b16 %v899
      %v967 = vunpack.c.l.b16 %v900
      %v968 = vunpack.c.l.b16 %v901
      %v969 = vunpack.c.l.b16 %v902
      %v970 = vpack.c.b16 %v939, %v938
      %v971 = vpack.c.b16 %v941, %v940
      %v972 = vpack.c.b16 %v943, %v942
      %v973 = vpack.c.b16 %v945, %v944
      %v974 = vpack.c.b16 %v947, %v946
      %v975 = vpack.c.b16 %v949, %v948
      %v976 = vpack.c.b16 %v951, %v950
      %v977 = vpack.c.b16 %v953, %v952
      %v978 = vpack.c.b16 %v955, %v954
      %v979 = vpack.c.b16 %v957, %v956
      %v980 = vpack.c.b16 %v959, %v958
      %v981 = vpack.c.b16 %v961, %v960
      %v982 = vpack.c.b16 %v963, %v962
      %v983 = vpack.c.b16 %v965, %v964
      %v984 = vpack.c.b16 %v967, %v966
      %v985 = vpack.c.b16 %v969, %v968
      %v988 = vunpack.c.l.b16 %v904
      %v989 = vunpack.c.l.b16 %v905
      %v990 = vpack.c.b16 %v989, %v988
      %v992 = vsel %vm359, %v970, 0
      %v995 = vsel %vm359, %v971, 0
      %v998 = vsel %vm359, %v972, 0
      %v1001 = vsel %vm359, %v973, 0
      %v1004 = vsel %vm359, %v974, 0
      %v1007 = vsel %vm359, %v975, 0
      %v1010 = vsel %vm359, %v976, 0
      %v1013 = vsel %vm359, %v977, 0
      %v1016 = vsel %vm359, %v978, 0
      %v1019 = vsel %vm359, %v979, 0
      %v1022 = vsel %vm359, %v980, 0
      %v1025 = vsel %vm359, %v981, 0
      %v1028 = vsel %vm359, %v982, 0
      %v1031 = vsel %vm359, %v983, 0
      %v1034 = vsel %vm359, %v984, 0
      %v1037 = vsel %vm359, %v985, 0
      %v1040 = vsel %vm408, %v990, 0
      %1042 = vmatprep.subr.bf16.mxu0 0
      %1043 = vmatpush1.bf16.msra.mxu0 %v1040
      %1044 = vmatprep.subr.bf16.mxu0 0
      %1045 = vmatpush1.bf16.msra.mxu0 0
      %1046 = vmatprep.subr.bf16.mxu0 0
      %1047 = vmatpush1.bf16.msra.mxu0 0
      %1048 = vmatprep.subr.bf16.mxu0 0
      %1049 = vmatpush1.bf16.msra.mxu0 0
      %1050 = vmatprep.subr.bf16.mxu0 0
      %1051 = vmatpush1.bf16.msra.mxu0 0
      %1052 = vmatprep.subr.bf16.mxu0 0
      %1053 = vmatpush1.bf16.msra.mxu0 0
      %1054 = vmatprep.subr.bf16.mxu0 0
      %1055 = vmatpush1.bf16.msra.mxu0 0
      %1056 = vmatprep.subr.bf16.mxu0 0
      %1057 = vmatpush1.bf16.msra.mxu0 0
      %1058 = vmatprep.subr.bf16.mxu0 0
      %1059 = vmatpush1.bf16.msra.mxu0 0
      %1060 = vmatprep.subr.bf16.mxu0 0
      %1061 = vmatpush1.bf16.msra.mxu0 0
      %1062 = vmatprep.subr.bf16.mxu0 0
      %1063 = vmatpush1.bf16.msra.mxu0 0
      %1064 = vmatprep.subr.bf16.mxu0 0
      %1065 = vmatpush1.bf16.msra.mxu0 0
      %1066 = vmatprep.subr.bf16.mxu0 0
      %1067 = vmatpush1.bf16.msra.mxu0 0
      %1068 = vmatprep.subr.bf16.mxu0 0
      %1069 = vmatpush1.bf16.msra.mxu0 0
      %1070 = vmatprep.subr.bf16.mxu0 0
      %1071 = vmatpush1.bf16.msra.mxu0 0
      %1072 = vmatprep.subr.bf16.mxu0 0
      %1073 = vmatpush1.bf16.msra.mxu0 0
      %1074 = vmatprep.mubr.bf16.mxu0 0
      %1075 = vmatmul.mubr.bf16.gmra.mrb[0].mxu0 %v992
      %v1076 = vpop.f32.mrb[0].mxu0
      %v1077 = vadd.f32 0.0, %v1076
      %v1078 = vpop.f32.mrb[0].mxu0
      %v1079 = vpop.f32.mrb[0].mxu0
      %v1080 = vadd.f32 0.0, %v1079
      %v1081 = vpop.f32.mrb[0].mxu0
      %1082 = vmatprep.mubr.bf16.mxu0 0
      %1083 = vmatmul.mubr.bf16.gmra.mrb[0].mxu0 %v995
      %v1084 = vpop.f32.mrb[0].mxu0
      %v1085 = vadd.f32 0.0, %v1084
      %v1086 = vpop.f32.mrb[0].mxu0
      %v1087 = vpop.f32.mrb[0].mxu0
      %v1088 = vadd.f32 0.0, %v1087
      %v1089 = vpop.f32.mrb[0].mxu0
      %1090 = vmatprep.mubr.bf16.mxu0 0
      %1091 = vmatmul.mubr.bf16.gmra.mrb[0].mxu0 %v998
      %v1092 = vpop.f32.mrb[0].mxu0
      %v1093 = vadd.f32 0.0, %v1092
      %v1094 = vpop.f32.mrb[0].mxu0
      %v1095 = vpop.f32.mrb[0].mxu0
      %v1096 = vadd.f32 0.0, %v1095
      %v1097 = vpop.f32.mrb[0].mxu0
      %1098 = vmatprep.mubr.bf16.mxu0 0
      %1099 = vmatmul.mubr.bf16.gmra.mrb[0].mxu0 %v1001
      %v1100 = vpop.f32.mrb[0].mxu0
      %v1101 = vadd.f32 0.0, %v1100
      %v1102 = vpop.f32.mrb[0].mxu0
      %v1103 = vpop.f32.mrb[0].mxu0
      %v1104 = vadd.f32 0.0, %v1103
      %v1105 = vpop.f32.mrb[0].mxu0
      %1106 = vmatprep.mubr.bf16.mxu0 0
      %1107 = vmatmul.mubr.bf16.gmra.mrb[0].mxu0 %v1004
      %v1108 = vpop.f32.mrb[0].mxu0
      %v1109 = vadd.f32 0.0, %v1108
      %v1110 = vpop.f32.mrb[0].mxu0
      %v1111 = vpop.f32.mrb[0].mxu0
      %v1112 = vadd.f32 0.0, %v1111
      %v1113 = vpop.f32.mrb[0].mxu0
      %1114 = vmatprep.mubr.bf16.mxu0 0
      %1115 = vmatmul.mubr.bf16.gmra.mrb[0].mxu0 %v1007
      %v1116 = vpop.f32.mrb[0].mxu0
      %v1117 = vadd.f32 0.0, %v1116
      %v1118 = vpop.f32.mrb[0].mxu0
      %v1119 = vpop.f32.mrb[0].mxu0
      %v1120 = vadd.f32 0.0, %v1119
      %v1121 = vpop.f32.mrb[0].mxu0
      %1122 = vmatprep.mubr.bf16.mxu0 0
      %1123 = vmatmul.mubr.bf16.gmra.mrb[0].mxu0 %v1010
      %v1124 = vpop.f32.mrb[0].mxu0
      %v1125 = vadd.f32 0.0, %v1124
      %v1126 = vpop.f32.mrb[0].mxu0
      %v1127 = vpop.f32.mrb[0].mxu0
      %v1128 = vadd.f32 0.0, %v1127
      %v1129 = vpop.f32.mrb[0].mxu0
      %1130 = vmatprep.mubr.bf16.mxu0 0
      %1131 = vmatmul.mubr.bf16.gmra.mrb[0].mxu0 %v1013
      %v1132 = vpop.f32.mrb[0].mxu0
      %v1133 = vadd.f32 0.0, %v1132
      %v1134 = vpop.f32.mrb[0].mxu0
      %v1135 = vpop.f32.mrb[0].mxu0
      %v1136 = vadd.f32 0.0, %v1135
      %v1137 = vpop.f32.mrb[0].mxu0
      %1138 = vmatprep.mubr.bf16.mxu0 0
      %1139 = vmatmul.mubr.bf16.gmra.mrb[0].mxu0 %v1016
      %v1140 = vpop.f32.mrb[0].mxu0
      %v1141 = vadd.f32 0.0, %v1140
      %v1142 = vpop.f32.mrb[0].mxu0
      %v1143 = vpop.f32.mrb[0].mxu0
      %v1144 = vadd.f32 0.0, %v1143
      %v1145 = vpop.f32.mrb[0].mxu0
      %1146 = vmatprep.mubr.bf16.mxu0 0
      %1147 = vmatmul.mubr.bf16.gmra.mrb[0].mxu0 %v1019
      %v1148 = vpop.f32.mrb[0].mxu0
      %v1149 = vadd.f32 0.0, %v1148
      %v1150 = vpop.f32.mrb[0].mxu0
      %v1151 = vpop.f32.mrb[0].mxu0
      %v1152 = vadd.f32 0.0, %v1151
      %v1153 = vpop.f32.mrb[0].mxu0
      %1154 = vmatprep.mubr.bf16.mxu0 0
      %1155 = vmatmul.mubr.bf16.gmra.mrb[0].mxu0 %v1022
      %v1156 = vpop.f32.mrb[0].mxu0
      %v1157 = vadd.f32 0.0, %v1156
      %v1158 = vpop.f32.mrb[0].mxu0
      %v1159 = vpop.f32.mrb[0].mxu0
      %v1160 = vadd.f32 0.0, %v1159
      %v1161 = vpop.f32.mrb[0].mxu0
      %1162 = vmatprep.mubr.bf16.mxu0 0
      %1163 = vmatmul.mubr.bf16.gmra.mrb[0].mxu0 %v1025
      %v1164 = vpop.f32.mrb[0].mxu0
      %v1165 = vadd.f32 0.0, %v1164
      %v1166 = vpop.f32.mrb[0].mxu0
      %v1167 = vpop.f32.mrb[0].mxu0
      %v1168 = vadd.f32 0.0, %v1167
      %v1169 = vpop.f32.mrb[0].mxu0
      %1170 = vmatprep.mubr.bf16.mxu0 0
      %1171 = vmatmul.mubr.bf16.gmra.mrb[0].mxu0 %v1028
      %v1172 = vpop.f32.mrb[0].mxu0
      %v1173 = vadd.f32 0.0, %v1172
      %v1174 = vpop.f32.mrb[0].mxu0
      %v1175 = vpop.f32.mrb[0].mxu0
      %v1176 = vadd.f32 0.0, %v1175
      %v1177 = vpop.f32.mrb[0].mxu0
      %1178 = vmatprep.mubr.bf16.mxu0 0
      %1179 = vmatmul.mubr.bf16.gmra.mrb[0].mxu0 %v1031
      %v1180 = vpop.f32.mrb[0].mxu0
      %v1181 = vadd.f32 0.0, %v1180
      %v1182 = vpop.f32.mrb[0].mxu0
      %v1183 = vpop.f32.mrb[0].mxu0
      %v1184 = vadd.f32 0.0, %v1183
      %v1185 = vpop.f32.mrb[0].mxu0
      %1186 = vmatprep.mubr.bf16.mxu0 0
      %1187 = vmatmul.mubr.bf16.gmra.mrb[0].mxu0 %v1034
      %v1188 = vpop.f32.mrb[0].mxu0
      %v1189 = vadd.f32 0.0, %v1188
      %v1190 = vpop.f32.mrb[0].mxu0
      %v1191 = vpop.f32.mrb[0].mxu0
      %v1192 = vadd.f32 0.0, %v1191
      %v1193 = vpop.f32.mrb[0].mxu0
      %1194 = vmatprep.mubr.bf16.mxu0 0
      %1195 = vmatmul.mubr.bf16.gmra.mrb[0].mxu0 %v1037
      %v1196 = vpop.f32.mrb[0].mxu0
      %v1197 = vadd.f32 0.0, %v1196
      %v1198 = vpop.f32.mrb[0].mxu0
      %v1199 = vpop.f32.mrb[0].mxu0
      %v1200 = vadd.f32 0.0, %v1199
      %v1201 = vpop.f32.mrb[0].mxu0
      %1202 = vdwg.mxu0
      %v1203 = vadd.f32 %v744, %v1077
      %v1204 = vadd.f32 %v747, %v1080
      %v1205 = vadd.f32 %v752, %v1085
      %v1206 = vadd.f32 %v755, %v1088
      %v1207 = vadd.f32 %v760, %v1093
      %v1208 = vadd.f32 %v763, %v1096
      %v1209 = vadd.f32 %v768, %v1101
      %v1210 = vadd.f32 %v771, %v1104
      %v1211 = vadd.f32 %v776, %v1109
      %v1212 = vadd.f32 %v779, %v1112
      %v1213 = vadd.f32 %v784, %v1117
      %v1214 = vadd.f32 %v787, %v1120
      %v1215 = vadd.f32 %v792, %v1125
      %v1216 = vadd.f32 %v795, %v1128
      %v1217 = vadd.f32 %v800, %v1133
      %v1218 = vadd.f32 %v803, %v1136
      %v1219 = vadd.f32 %v808, %v1141
      %v1220 = vadd.f32 %v811, %v1144
      %v1221 = vadd.f32 %v816, %v1149
      %v1222 = vadd.f32 %v819, %v1152
      %v1223 = vadd.f32 %v824, %v1157
      %v1224 = vadd.f32 %v827, %v1160
      %v1225 = vadd.f32 %v832, %v1165
      %v1226 = vadd.f32 %v835, %v1168
      %v1227 = vadd.f32 %v840, %v1173
      %v1228 = vadd.f32 %v843, %v1176
      %v1229 = vadd.f32 %v848, %v1181
      %v1230 = vadd.f32 %v851, %v1184
      %v1231 = vadd.f32 %v856, %v1189
      %v1232 = vadd.f32 %v859, %v1192
      %v1233 = vadd.f32 %v864, %v1197
      %v1234 = vadd.f32 %v867, %v1200
      %v1235 = vld [vmem:[%s2] sm:$0x1]
      %v1237 = vlaneseq
      %v1238 = vshrl.u32 %v1237, 7
      %v1239 = vsub.s32 0, %v1238
      %v1240 = vrot.slane %v1235, %v1239
      %v1242 = vadd.f32 %v1203, %v1240
      %v1243 = vadd.f32 %v1204, %v1240
      %v1244 = vadd.f32 %v1205, %v1240
      %v1245 = vadd.f32 %v1206, %v1240
      %v1246 = vadd.f32 %v1207, %v1240
      %v1247 = vadd.f32 %v1208, %v1240
      %v1248 = vadd.f32 %v1209, %v1240
      %v1249 = vadd.f32 %v1210, %v1240
      %v1250 = vadd.f32 %v1211, %v1240
      %v1251 = vadd.f32 %v1212, %v1240
      %v1252 = vadd.f32 %v1213, %v1240
      %v1253 = vadd.f32 %v1214, %v1240
      %v1254 = vadd.f32 %v1215, %v1240
      %v1255 = vadd.f32 %v1216, %v1240
      %v1256 = vadd.f32 %v1217, %v1240
      %v1257 = vadd.f32 %v1218, %v1240
      %v1258 = vadd.f32 %v1219, %v1240
      %v1259 = vadd.f32 %v1220, %v1240
      %v1260 = vadd.f32 %v1221, %v1240
      %v1261 = vadd.f32 %v1222, %v1240
      %v1262 = vadd.f32 %v1223, %v1240
      %v1263 = vadd.f32 %v1224, %v1240
      %v1264 = vadd.f32 %v1225, %v1240
      %v1265 = vadd.f32 %v1226, %v1240
      %v1266 = vadd.f32 %v1227, %v1240
      %v1267 = vadd.f32 %v1228, %v1240
      %v1268 = vadd.f32 %v1229, %v1240
      %v1269 = vadd.f32 %v1230, %v1240
      %v1270 = vadd.f32 %v1231, %v1240
      %v1271 = vadd.f32 %v1232, %v1240
      %v1272 = vadd.f32 %v1233, %v1240
      %v1273 = vadd.f32 %v1234, %v1240
      %vm1274 = vcmask 64512
      %1275 = vst.msk [vmem:[%s201] sm:$0xff] %vm1274, %v1242
      %1276 = vst.msk [vmem:[%s201 + $0x8] sm:$0xff] %vm1274, %v1243
      %1277 = vst.msk [vmem:[%s201 + $0x10] sm:$0xff] %vm1274, %v1244
      %1278 = vst.msk [vmem:[%s201 + $0x18] sm:$0xff] %vm1274, %v1245
      %1279 = vst.msk [vmem:[%s201 + $0x20] sm:$0xff] %vm1274, %v1246
      %1280 = vst.msk [vmem:[%s201 + $0x28] sm:$0xff] %vm1274, %v1247
      %1281 = vst.msk [vmem:[%s201 + $0x30] sm:$0xff] %vm1274, %v1248
      %1282 = vst.msk [vmem:[%s201 + $0x38] sm:$0xff] %vm1274, %v1249
      %1283 = vst.msk [vmem:[%s201 + $0x40] sm:$0xff] %vm1274, %v1250
      %1284 = vst.msk [vmem:[%s201 + $0x48] sm:$0xff] %vm1274, %v1251
      %1285 = vst.msk [vmem:[%s201 + $0x50] sm:$0xff] %vm1274, %v1252
      %1286 = vst.msk [vmem:[%s201 + $0x58] sm:$0xff] %vm1274, %v1253
      %1287 = vst.msk [vmem:[%s201 + $0x60] sm:$0xff] %vm1274, %v1254
      %1288 = vst.msk [vmem:[%s201 + $0x68] sm:$0xff] %vm1274, %v1255
      %1289 = vst.msk [vmem:[%s201 + $0x70] sm:$0xff] %vm1274, %v1256
      %1290 = vst.msk [vmem:[%s201 + $0x78] sm:$0xff] %vm1274, %v1257
      %1291 = vst.msk [vmem:[%s201 + $0x80] sm:$0xff] %vm1274, %v1258
      %1292 = vst.msk [vmem:[%s201 + $0x88] sm:$0xff] %vm1274, %v1259
      %1293 = vst.msk [vmem:[%s201 + $0x90] sm:$0xff] %vm1274, %v1260
      %1294 = vst.msk [vmem:[%s201 + $0x98] sm:$0xff] %vm1274, %v1261
      %1295 = vst.msk [vmem:[%s201 + $0xa0] sm:$0xff] %vm1274, %v1262
      %1296 = vst.msk [vmem:[%s201 + $0xa8] sm:$0xff] %vm1274, %v1263
      %1297 = vst.msk [vmem:[%s201 + $0xb0] sm:$0xff] %vm1274, %v1264
      %1298 = vst.msk [vmem:[%s201 + $0xb8] sm:$0xff] %vm1274, %v1265
      %1299 = vst.msk [vmem:[%s201 + $0xc0] sm:$0xff] %vm1274, %v1266
      %1300 = vst.msk [vmem:[%s201 + $0xc8] sm:$0xff] %vm1274, %v1267
      %1301 = vst.msk [vmem:[%s201 + $0xd0] sm:$0xff] %vm1274, %v1268
      %1302 = vst.msk [vmem:[%s201 + $0xd8] sm:$0xff] %vm1274, %v1269
      %1303 = vst.msk [vmem:[%s201 + $0xe0] sm:$0xff] %vm1274, %v1270
      %1304 = vst.msk [vmem:[%s201 + $0xe8] sm:$0xff] %vm1274, %v1271
      %1305 = vst.msk [vmem:[%s201 + $0xf0] sm:$0xff] %vm1274, %v1272
      %1306 = vst.msk [vmem:[%s201 + $0xf8] sm:$0xff] %vm1274, %v1273
      %s1307 = smul.u32 16, %s19
      %p1308 = scmp.lt.s32.totalorder %s18, 1
      %s1309 = scalar_select %p1308, %s18, 1
      %p1310 = scmp.lt.s32.totalorder %s1307, 15
      %s1311 = scalar_select %p1310, %s1307, 15
      %s1312 = smul.addr %s1311, 2
      %s1313 = smul.addr %s1309, 32
      %s1314 = sadd.s32 %s1312, %s1313
      %s1315 = smul.addr %s1314, 8
      %s1316 = scalar_lea.vmem %s3, %s1315
      // Predicated region
      $region33: #{_conv_layer_forward.1} parent=31 // pred_check
        %p1317 = pneg %p116
      $region34: #{_conv_layer_forward.1} parent=31 // pred_check_branch
        %1319 = sbr.rel (%p1317) target = $region36
      $region35: #{_conv_layer_forward.1} parent=31 // pred_region
        %s1320 = smul.u32 16, %s19
      $region36: #{_conv_layer_forward.1} parent=31 // pred_fallthru
        _
    $region32: #{_conv_layer_forward.1} parent=5 // pred_fallthru
      _
    %p1321 = scmp.le.s32.totalorder 2, %s9
    // Predicated region
    $region37: #{_conv_layer_forward.1} parent=5 // pred_check
      %p1322 = pneg %p1321
    $region38: #{_conv_layer_forward.1} parent=5 // pred_check_branch
      %1324 = sbr.rel (%p1322) target = $region40
    $region39: #{_conv_layer_forward.1} parent=5 // pred_region
      %s1325 = ssub.s32 %s9, 2
      // Predicated region
      $region41: #{_conv_layer_forward.1} parent=39 // pred_check
        %p1326 = pneg %p122
      $region42: #{_conv_layer_forward.1} parent=39 // pred_check_branch
        %1328 = sbr.rel (%p1326) target = $region44
      $region43: #{_conv_layer_forward.1} parent=39 // pred_region
        %s1329 = smul.u32 16, %s21
        %p1330 = scmp.lt.s32.totalorder %s20, 1
        %s1331 = scalar_select %p1330, %s20, 1
        %p1332 = scmp.lt.s32.totalorder %s1329, 15
        %s1333 = scalar_select %p1332, %s1329, 15
        %s1334 = smul.addr %s1333, 2
        %s1335 = smul.addr %s1331, 32
        %s1336 = sadd.s32 %s1334, %s1335
        %s1337 = smul.addr %s1336, 8
        %s1338 = scalar_lea.vmem %s3, %s1337
      $region44: #{_conv_layer_forward.1} parent=39 // pred_fallthru
        _
    $region40: #{_conv_layer_forward.1} parent=5 // pred_fallthru
      _
  $region6: #{_conv_layer_forward.1} parent=0 // loop_footer
    %s13 = sadd.s32 1, %s9
  $region7: #{_conv_layer_forward.1} parent=0 // loop_footer_branch
    %8 = sbr.rel target = $region3
  $region8: #{_conv_layer_forward.1} parent=0 // loop_exit
    _

</llo_original>
